<compile_context>
chip_gen: v5e
topology: v5e:2x2
jax: 0.10.0
libtpu: 0.0.40
codegen_flags: <defaults>
</compile_context>

<pallas_src>
import functools

import jax
import jax.numpy as jnp
from jax.experimental import pallas as pl
from jax.experimental.pallas import tpu as pltpu

_LANE = 128                 # lanes per vreg (fast axis)
_SUB = 8                    # sublanes per vreg
_TARGET_BLOCK_ROWS = 4096   # 4096x128 f32 = 2 MiB per input per grid step


def _detect_num_parallel_cores():
    """Use a 2-wide 'parallel' grid axis only on v7x (2 TensorCores/chip)."""
    try:
        kind = jax.devices()[0].device_kind.lower()
    except Exception:
        return 1
    return 2 if "7" in kind else 1


def _bce_and_prob(x, lab, apply_sigmoid):
    """Elementwise probability and per-element BCE (f32 in -> f32 out).

    Shared by the Pallas kernel (on (block_rows, 128) tiles) and by the
    wrapper-side tail handling, so the math exists exactly once.
    """
    if apply_sigmoid:
        # Stable sigmoid + BCE-with-logits sharing a single exp().
        t = jnp.exp(-jnp.abs(x))                  # exp(-|x|) in (0, 1]
        inv = 1.0 / (1.0 + t)
        p = jnp.where(x >= 0, inv, t * inv)       # sigmoid(x)
        log1p_t = jnp.log(1.0 + t)
        sp_pos = jnp.maximum(x, 0.0) + log1p_t    # softplus(x)  = -log(1 - p)
        sp_neg = sp_pos - x                       # softplus(-x) = -log(p)
        # F.binary_cross_entropy clamps the log terms at -100.
        bce = (lab * jnp.minimum(sp_neg, 100.0)
               + (1.0 - lab) * jnp.minimum(sp_pos, 100.0))
    else:
        # Prediction already holds probabilities.
        p = x
        logp = jnp.maximum(jnp.log(p), -100.0)
        log1mp = jnp.maximum(jnp.log(1.0 - p), -100.0)
        bce = -(lab * logp + (1.0 - lab) * log1mp)
    return p, bce


def _dice_bce_partial_kernel(p_ref, l_ref, out_ref, *, apply_sigmoid, block_rows):
    """Accumulates [sum(p*l), sum(p), sum(l), sum(bce)] as (8,128) lane slabs."""
    s = pl.program_id(1)          # reduction ("arbitrary") axis

    @pl.when(s == 0)
    def _init():
        out_ref[...] = jnp.zeros_like(out_ref)

    x = p_ref[...].astype(jnp.float32)
    lab = l_ref[...].astype(jnp.float32)
    p, bce = _bce_and_prob(x, lab, apply_sigmoid)

    groups = block_rows // _SUB

    def _reduce(v):
        # (block_rows, 128) -> (groups, 8, 128) is a layout no-op; summing over
        # the leading axis is a chain of (8,128) vreg adds on the VPU (no XLU).
        return jnp.sum(v.reshape(groups, _SUB, _LANE), axis=0)

    # Accumulate into the resident output block: 4x(8,128) RMW per step only.
    out_ref[0] += _reduce(p * lab)
    out_ref[1] += _reduce(p)
    out_ref[2] += _reduce(lab)
    out_ref[3] += _reduce(bce)


def dice_bce_loss(prediction, label, smooth=1.0, used_sigmoid_actFun=False,
                  *, block_rows=_TARGET_BLOCK_ROWS, num_cores=None):
    """Pallas equivalent of DiceBCELoss.forward. Returns a scalar f32."""
    apply_sigmoid = not used_sigmoid_actFun
    total = int(prediction.size)
    assert total > 0 and int(label.size) == total

    flat_p = prediction.reshape(-1)     # contiguous flatten: free
    flat_l = label.reshape(-1)

    rows_full = total // _LANE

    # Block geometry: the kernel only ever touches full, in-bounds blocks; the
    # remainder (< one block, plus any sub-128 tail) is handled in the wrapper.
    req_rows = max(_SUB, (int(block_rows) // _SUB) * _SUB)
    cap_rows = (rows_full // _SUB) * _SUB
    if cap_rows >= _SUB:
        blk_rows = min(req_rows, cap_rows)
        nblocks = rows_full // blk_rows
    else:
        blk_rows = 0
        nblocks = 0

    if num_cores is None:
        num_cores = _detect_num_parallel_cores()
    num_cores = max(1, int(num_cores))
    cores = num_cores if (num_cores > 1 and nblocks >= 2 * num_cores) else 1
    steps = nblocks // cores if nblocks else 0
    rows_main = cores * steps * blk_rows
    main_elems = rows_main * _LANE

    sums = jnp.zeros((4,), jnp.float32)

    if rows_main > 0:
        if total == rows_full * _LANE:
            # Common case: pure reshape of the contiguous flatten (no HBM copy).
            p2 = flat_p.reshape(rows_full, _LANE)
            l2 = flat_l.reshape(rows_full, _LANE)
        else:
            # Rare case (total % 128 != 0): one prefix slice of the main part.
            p2 = flat_p[:main_elems].reshape(rows_main, _LANE)
            l2 = flat_l[:main_elems].reshape(rows_main, _LANE)

        kernel = functools.partial(_dice_bce_partial_kernel,
                                   apply_sigmoid=apply_sigmoid,
                                   block_rows=blk_rows)
        in_spec = pl.BlockSpec((blk_rows, _LANE), lambda c, s: (c * steps + s, 0))

        # Double-buffered inputs + small resident output block + slack.
        block_bytes = blk_rows * _LANE * (p2.dtype.itemsize + l2.dtype.itemsize)
        vmem_limit = int(min(max(2 * block_bytes + (4 << 20), 16 << 20), 48 << 20))

        partial = pl.pallas_call(
            kernel,
            out_shape=jax.ShapeDtypeStruct((cores * 4, _SUB, _LANE), jnp.float32),
            grid_spec=pltpu.PrefetchScalarGridSpec(
                num_scalar_prefetch=0,
                grid=(cores, steps),
                in_specs=[in_spec, in_spec],
                out_specs=pl.BlockSpec((4, _SUB, _LANE), lambda c, s: (c, 0, 0)),
            ),
            compiler_params=pltpu.CompilerParams(
                dimension_semantics=("parallel", "arbitrary"),
                vmem_limit_bytes=vmem_limit),
        )(p2, l2)

        sums = sums + jnp.sum(partial.reshape(cores, 4, _SUB, _LANE),
                              axis=(0, 2, 3))

    if main_elems < total:
        # Tail (< one block worth of elements): plain jnp in the wrapper; tiny.
        x_t = flat_p[main_elems:].astype(jnp.float32)
        l_t = flat_l[main_elems:].astype(jnp.float32)
        p_t, bce_t = _bce_and_prob(x_t, l_t, apply_sigmoid)
        sums = sums + jnp.stack([jnp.sum(p_t * l_t), jnp.sum(p_t),
                                 jnp.sum(l_t), jnp.sum(bce_t)])

    inter, sp, sl, sb = sums[0], sums[1], sums[2], sums[3]
    # NOTE: reproduces the original PyTorch operator precedence exactly:
    # dice_loss = 1 - (2*intersection + smooth / (sum_p + sum_l + smooth))
    dice_loss = 1.0 - (2.0 * inter + smooth / (sp + sl + smooth))
    bce_mean = sb / total
    return bce_mean + dice_loss


def _reference(prediction, label, smooth=1.0, used_sigmoid_actFun=False):
    """Pure-JAX reference mirroring the PyTorch module."""
    p = prediction if used_sigmoid_actFun else jax.nn.sigmoid(prediction)
    p = p.reshape(-1).astype(jnp.float32)
    lab = label.reshape(-1).astype(jnp.float32)
    intersection = jnp.sum(p * lab)
    dice_loss = 1.0 - (2.0 * intersection +
                       smooth / (jnp.sum(p) + jnp.sum(lab) + smooth))
    logp = jnp.maximum(jnp.log(p), -100.0)
    log1mp = jnp.maximum(jnp.log(1.0 - p), -100.0)
    bce = jnp.mean(-(lab * logp + (1.0 - lab) * log1mp))
    return bce + dice_loss


if __name__ == "__main__":
    key = jax.random.PRNGKey(0)
    k1, k2, k3, k4 = jax.random.split(key, 4)

    # 1) Logits path (sigmoid applied in-kernel), NCHW segmentation shape.
    prediction = jax.random.normal(k1, (2, 4, 16, 16), dtype=jnp.float32)
    label = jax.random.bernoulli(k2, 0.5, (2, 4, 16, 16)).astype(jnp.float32)
    out = jax.block_until_ready(
        dice_bce_loss(prediction, label, smooth=1.0, used_sigmoid_actFun=False))
    ref = _reference(prediction, label, smooth=1.0, used_sigmoid_actFun=False)
    assert jnp.allclose(out, ref, rtol=1e-5, atol=1e-5), (out, ref)

    # 2) Probability path (used_sigmoid_actFun=True).
    probs = jax.random.uniform(k3, (2, 4, 16, 16), jnp.float32, 0.01, 0.99)
    out2 = jax.block_until_ready(
        dice_bce_loss(probs, label, smooth=1.0, used_sigmoid_actFun=True))
    ref2 = _reference(probs, label, smooth=1.0, used_sigmoid_actFun=True)
    assert jnp.allclose(out2, ref2, rtol=1e-5, atol=1e-5), (out2, ref2)

    # 3) Odd shape (total not a multiple of 128): exercises the wrapper tail.
    pred3 = jax.random.normal(k4, (2, 3, 15, 17), dtype=jnp.float32)
    lab3 = jax.random.bernoulli(k2, 0.5, (2, 3, 15, 17)).astype(jnp.float32)
    out3 = jax.block_until_ready(
        dice_bce_loss(pred3, lab3, smooth=1.0, used_sigmoid_actFun=False))
    ref3 = _reference(pred3, lab3, smooth=1.0, used_sigmoid_actFun=False)
    assert jnp.allclose(out3, ref3, rtol=1e-5, atol=1e-5), (out3, ref3)

    # 4) Multi-block reduction + 2-wide "parallel" core axis (small blocks keep
    #    the test shape tiny; on 1-TC chips the axis is just iterated).
    pred4 = jax.random.normal(k1, (2, 8, 32, 32), dtype=jnp.float32)
    lab4 = jax.random.bernoulli(k3, 0.5, (2, 8, 32, 32)).astype(jnp.float32)
    out4 = jax.block_until_ready(
        dice_bce_loss(pred4, lab4, smooth=1.0, used_sigmoid_actFun=False,
                      block_rows=32, num_cores=2))
    ref4 = _reference(pred4, lab4, smooth=1.0, used_sigmoid_actFun=False)
    assert jnp.allclose(out4, ref4, rtol=1e-5, atol=1e-5), (out4, ref4)

    # 5) Block count that does not divide the rows: kernel main part plus a
    #    larger-than-128 tail handled in the wrapper.
    out5 = jax.block_until_ready(
        dice_bce_loss(pred4, lab4, smooth=1.0, used_sigmoid_actFun=False,
                      block_rows=24, num_cores=1))
    assert jnp.allclose(out5, ref4, rtol=1e-5, atol=1e-5), (out5, ref4)

    print("KERNEL_OK")
</pallas_src>

<mosaic_0001>
module attributes {stable_mosaic.version = 11 : i64} {
  func.func @_dice_bce_partial_kernel(%arg0: i32, %arg1: i32, %arg2: memref<16x128xf32, #tpu.memory_space<vmem>>, %arg3: memref<16x128xf32, #tpu.memory_space<vmem>>, %arg4: memref<4x8x128xf32, #tpu.memory_space<vmem>>) attributes {dimension_semantics = [#tpu.dimension_semantics<parallel>, #tpu.dimension_semantics<arbitrary>], iteration_bounds = array<i64: 1, 1>, scalar_prefetch = 0 : i64, scratch_operands = 0 : i64, tpu.core_type = #tpu.core_type<tc>, window_params = [{transform_indices = @transform_0, window_bounds = array<i64: 16, 128>}, {transform_indices = @transform_1, window_bounds = array<i64: 16, 128>}, {transform_indices = @transform_2, window_bounds = array<i64: 4, 8, 128>}]} {
    %c0_i32 = arith.constant 0 : i32
    %0 = arith.cmpi eq, %arg1, %c0_i32 : i32
    %1 = arith.extui %0 : i1 to i32
    %c0_i32_0 = arith.constant 0 : i32
    %2 = arith.cmpi ne, %1, %c0_i32_0 : i32
    scf.if %2 {
      %cst_37 = arith.constant 0.000000e+00 : f32
      %66 = vector.broadcast %cst_37 : f32 to vector<4x8x128xf32>
      %c0_38 = arith.constant 0 : index
      %c0_39 = arith.constant 0 : index
      %c0_40 = arith.constant 0 : index
      %67 = vector.load %arg4[%c0_38, %c0_39, %c0_40] : memref<4x8x128xf32, #tpu.memory_space<vmem>>, vector<4x8x128xf32>
      tpu.vector_store %arg4[%c0_38, %c0_39, %c0_40], %66 {strides = array<i32>} : memref<4x8x128xf32, #tpu.memory_space<vmem>>, vector<4x8x128xf32>,
    } else {
    }
    %c0 = arith.constant 0 : index
    %c0_1 = arith.constant 0 : index
    %3 = vector.load %arg2[%c0, %c0_1] : memref<16x128xf32, #tpu.memory_space<vmem>>, vector<16x128xf32>
    %c0_2 = arith.constant 0 : index
    %c0_3 = arith.constant 0 : index
    %4 = vector.load %arg3[%c0_2, %c0_3] : memref<16x128xf32, #tpu.memory_space<vmem>>, vector<16x128xf32>
    %5 = math.absf %3 : vector<16x128xf32>
    %cst = arith.constant 0.000000e+00 : f32
    %6 = vector.broadcast %cst : f32 to vector<16x128xf32>
    %7 = arith.subf %6, %5 : vector<16x128xf32>
    %8 = math.exp %7 : vector<16x128xf32>
    %cst_4 = arith.constant 1.000000e+00 : f32
    %9 = vector.broadcast %cst_4 : f32 to vector<16x128xf32>
    %10 = arith.addf %9, %8 : vector<16x128xf32>
    %cst_5 = arith.constant 1.000000e+00 : f32
    %11 = vector.broadcast %cst_5 : f32 to vector<16x128xf32>
    %12 = arith.divf %11, %10 : vector<16x128xf32>
    %cst_6 = arith.constant 0.000000e+00 : f32
    %13 = vector.broadcast %cst_6 : f32 to vector<16x128xf32>
    %14 = arith.cmpf oge, %3, %13 : vector<16x128xf32>
    %15 = arith.mulf %8, %12 : vector<16x128xf32>
    %16 = arith.select %14, %12, %15 : vector<16x128xi1>, vector<16x128xf32>
    %cst_7 = arith.constant 1.000000e+00 : f32
    %17 = vector.broadcast %cst_7 : f32 to vector<16x128xf32>
    %18 = arith.addf %17, %8 : vector<16x128xf32>
    %19 = math.log %18 : vector<16x128xf32>
    %cst_8 = arith.constant 0.000000e+00 : f32
    %20 = vector.broadcast %cst_8 : f32 to vector<16x128xf32>
    %21 = arith.maximumf %3, %20 : vector<16x128xf32>
    %22 = arith.addf %21, %19 : vector<16x128xf32>
    %23 = arith.subf %22, %3 : vector<16x128xf32>
    %cst_9 = arith.constant 1.000000e+02 : f32
    %24 = vector.broadcast %cst_9 : f32 to vector<16x128xf32>
    %25 = arith.minimumf %23, %24 : vector<16x128xf32>
    %26 = arith.mulf %4, %25 : vector<16x128xf32>
    %cst_10 = arith.constant 1.000000e+00 : f32
    %27 = vector.broadcast %cst_10 : f32 to vector<16x128xf32>
    %28 = arith.subf %27, %4 : vector<16x128xf32>
    %cst_11 = arith.constant 1.000000e+02 : f32
    %29 = vector.broadcast %cst_11 : f32 to vector<16x128xf32>
    %30 = arith.minimumf %22, %29 : vector<16x128xf32>
    %31 = arith.mulf %28, %30 : vector<16x128xf32>
    %32 = arith.addf %26, %31 : vector<16x128xf32>
    %c0_12 = arith.constant 0 : index
    %c0_13 = arith.constant 0 : index
    %c0_14 = arith.constant 0 : index
    %33 = vector.load %arg4[%c0_12, %c0_13, %c0_14] : memref<4x8x128xf32, #tpu.memory_space<vmem>>, vector<1x8x128xf32>
    %34 = vector.shape_cast %33 : vector<1x8x128xf32> to vector<8x128xf32>
    %35 = arith.mulf %16, %4 : vector<16x128xf32>
    %36 = vector.shape_cast %35 : vector<16x128xf32> to vector<2x8x128xf32>
    %cst_15 = arith.constant dense<0.000000e+00> : vector<8x128xf32>
    %37 = vector.multi_reduction <add>, %36, %cst_15 [0] : vector<2x8x128xf32> to vector<8x128xf32>
    %38 = arith.addf %34, %37 : vector<8x128xf32>
    %c0_16 = arith.constant 0 : index
    %c0_17 = arith.constant 0 : index
    %c0_18 = arith.constant 0 : index
    %39 = vector.load %arg4[%c0_16, %c0_17, %c0_18] : memref<4x8x128xf32, #tpu.memory_space<vmem>>, vector<1x8x128xf32>
    %40 = vector.shape_cast %39 : vector<1x8x128xf32> to vector<8x128xf32>
    %41 = vector.shape_cast %38 : vector<8x128xf32> to vector<1x8x128xf32>
    tpu.vector_store %arg4[%c0_16, %c0_17, %c0_18], %41 {strides = array<i32>} : memref<4x8x128xf32, #tpu.memory_space<vmem>>, vector<1x8x128xf32>,
    %c1 = arith.constant 1 : index
    %c0_19 = arith.constant 0 : index
    %c0_20 = arith.constant 0 : index
    %42 = vector.load %arg4[%c1, %c0_19, %c0_20] : memref<4x8x128xf32, #tpu.memory_space<vmem>>, vector<1x8x128xf32>
    %43 = vector.shape_cast %42 : vector<1x8x128xf32> to vector<8x128xf32>
    %44 = vector.shape_cast %16 : vector<16x128xf32> to vector<2x8x128xf32>
    %cst_21 = arith.constant dense<0.000000e+00> : vector<8x128xf32>
    %45 = vector.multi_reduction <add>, %44, %cst_21 [0] : vector<2x8x128xf32> to vector<8x128xf32>
    %46 = arith.addf %43, %45 : vector<8x128xf32>
    %c1_22 = arith.constant 1 : index
    %c0_23 = arith.constant 0 : index
    %c0_24 = arith.constant 0 : index
    %47 = vector.load %arg4[%c1_22, %c0_23, %c0_24] : memref<4x8x128xf32, #tpu.memory_space<vmem>>, vector<1x8x128xf32>
    %48 = vector.shape_cast %47 : vector<1x8x128xf32> to vector<8x128xf32>
    %49 = vector.shape_cast %46 : vector<8x128xf32> to vector<1x8x128xf32>
    tpu.vector_store %arg4[%c1_22, %c0_23, %c0_24], %49 {strides = array<i32>} : memref<4x8x128xf32, #tpu.memory_space<vmem>>, vector<1x8x128xf32>,
    %c2 = arith.constant 2 : index
    %c0_25 = arith.constant 0 : index
    %c0_26 = arith.constant 0 : index
    %50 = vector.load %arg4[%c2, %c0_25, %c0_26] : memref<4x8x128xf32, #tpu.memory_space<vmem>>, vector<1x8x128xf32>
    %51 = vector.shape_cast %50 : vector<1x8x128xf32> to vector<8x128xf32>
    %52 = vector.shape_cast %4 : vector<16x128xf32> to vector<2x8x128xf32>
    %cst_27 = arith.constant dense<0.000000e+00> : vector<8x128xf32>
    %53 = vector.multi_reduction <add>, %52, %cst_27 [0] : vector<2x8x128xf32> to vector<8x128xf32>
    %54 = arith.addf %51, %53 : vector<8x128xf32>
    %c2_28 = arith.constant 2 : index
    %c0_29 = arith.constant 0 : index
    %c0_30 = arith.constant 0 : index
    %55 = vector.load %arg4[%c2_28, %c0_29, %c0_30] : memref<4x8x128xf32, #tpu.memory_space<vmem>>, vector<1x8x128xf32>
    %56 = vector.shape_cast %55 : vector<1x8x128xf32> to vector<8x128xf32>
    %57 = vector.shape_cast %54 : vector<8x128xf32> to vector<1x8x128xf32>
    tpu.vector_store %arg4[%c2_28, %c0_29, %c0_30], %57 {strides = array<i32>} : memref<4x8x128xf32, #tpu.memory_space<vmem>>, vector<1x8x128xf32>,
    %c3 = arith.constant 3 : index
    %c0_31 = arith.constant 0 : index
    %c0_32 = arith.constant 0 : index
    %58 = vector.load %arg4[%c3, %c0_31, %c0_32] : memref<4x8x128xf32, #tpu.memory_space<vmem>>, vector<1x8x128xf32>
    %59 = vector.shape_cast %58 : vector<1x8x128xf32> to vector<8x128xf32>
    %60 = vector.shape_cast %32 : vector<16x128xf32> to vector<2x8x128xf32>
    %cst_33 = arith.constant dense<0.000000e+00> : vector<8x128xf32>
    %61 = vector.multi_reduction <add>, %60, %cst_33 [0] : vector<2x8x128xf32> to vector<8x128xf32>
    %62 = arith.addf %59, %61 : vector<8x128xf32>
    %c3_34 = arith.constant 3 : index
    %c0_35 = arith.constant 0 : index
    %c0_36 = arith.constant 0 : index
    %63 = vector.load %arg4[%c3_34, %c0_35, %c0_36] : memref<4x8x128xf32, #tpu.memory_space<vmem>>, vector<1x8x128xf32>
    %64 = vector.shape_cast %63 : vector<1x8x128xf32> to vector<8x128xf32>
    %65 = vector.shape_cast %62 : vector<8x128xf32> to vector<1x8x128xf32>
    tpu.vector_store %arg4[%c3_34, %c0_35, %c0_36], %65 {strides = array<i32>} : memref<4x8x128xf32, #tpu.memory_space<vmem>>, vector<1x8x128xf32>,
    return
  }
  func.func @transform_0(%arg0: i32, %arg1: i32) -> (i32, i32) {
    %c1_i32 = arith.constant 1 : i32
    %0 = arith.muli %arg0, %c1_i32 : i32
    %1 = arith.addi %0, %arg1 : i32
    %c0_i32 = arith.constant 0 : i32
    %c0_i32_0 = arith.constant 0 : i32
    return %1, %c0_i32 : i32, i32
  }
  func.func @transform_1(%arg0: i32, %arg1: i32) -> (i32, i32) {
    %c1_i32 = arith.constant 1 : i32
    %0 = arith.muli %arg0, %c1_i32 : i32
    %1 = arith.addi %0, %arg1 : i32
    %c0_i32 = arith.constant 0 : i32
    %c0_i32_0 = arith.constant 0 : i32
    return %1, %c0_i32 : i32, i32
  }
  func.func @transform_2(%arg0: i32, %arg1: i32) -> (i32, i32, i32) {
    %c0_i32 = arith.constant 0 : i32
    %c0_i32_0 = arith.constant 0 : i32
    %c0_i32_1 = arith.constant 0 : i32
    return %arg0, %c0_i32, %c0_i32_0 : i32, i32, i32
  }
}

</mosaic_0001>

<llo_original>
// kernel: tpu_custom_call.1
$region0: #{tpu_custom_call.1}
  #allocation0 [shape = 'u32[]', space=smem, size = 0x4, offset = 0x4, fixed_abs, tag = 'smem constant byte address 0x4 - core index']
  #allocation1 [shape = 'u32[72,128]{1,0:T(1,128)}', space=vmem, size = 0x9000, scoped, tag = 'internal scratch']
  %s0 = inlined_call_operand.hbm [shape: f32[16,128], index: 0, kind: input, shape index: {}]
  %s1 = inlined_call_operand.hbm [shape: f32[16,128], index: 1, kind: input, shape index: {}]
  %s2 = inlined_call_operand.hbm [shape: f32[4,8,128], index: 2, kind: output, shape index: {}]
  %s3 = sld [smem:[#allocation0]]
  $region30: #{tpu_custom_call.1} parent=0
    _
  %s5 = ssub.s32 1, %s3
  %s6 = scalar_select 0, %s5, %s3
  $region1: #{tpu_custom_call.1} parent=0
    #allocation2 [shape = 'u8[8192]{0}', space=vmem, size = 0x2000, scoped, tag = 'input window, operand 0, single buffered']
    #allocation3 [shape = 's32[1]{0}', space=sflag, size = 0x4, scoped, tag = 'scoped memory for tpu_custom_call.1']
    #allocation4 [shape = 's32[1]{0}', space=sflag, size = 0x4, scoped, tag = 'scoped memory for tpu_custom_call.1']
    #allocation5 [shape = 'u8[8192]{0}', space=vmem, size = 0x2000, scoped, tag = 'input window, operand 1, single buffered']
    #allocation6 [shape = 's32[1]{0}', space=sflag, size = 0x4, scoped, tag = 'scoped memory for tpu_custom_call.1']
    #allocation7 [shape = 'u8[16384]{0}', space=vmem, size = 0x4000, scoped, tag = 'output window, operand 0, single buffered']
    %7 = vsyncpa [#allocation3], 0
    %8 = vsyncpa [#allocation6], 0
    %9 = vsyncpa [#allocation4], 0
    // Predicated region
    $region2: #{tpu_custom_call.1} parent=1 // pred_check
      _
    $region3: #{tpu_custom_call.1} parent=1 // pred_check_branch
      %11 = sbr.rel (0) target = $region5
    $region4: #{tpu_custom_call.1} parent=1 // pred_region
      %s12 = sadd.s32 0, 0
      %s13 = smul.u32 2, %s12
      %15 = vsyncadd [#allocation3], 0
      %s16 = smul.addr %s13, 8
      %s17 = scalar_lea.hbm %s0, %s16
      %s18 = sshll.u32 %s17, 4
      %s19 = int_to_ptr.hbm [resolvable:$true] %s18
      %s20 = sshll.u32 [#allocation2], 4
      %s21 = int_to_ptr.vmem [resolvable:$true] %s20
      %26 = dma.hbm_to_vmem [thread:$0]  %s19, 256, %s21, [#allocation3], 128, 128, 8
    $region5: #{tpu_custom_call.1} parent=1 // pred_fallthru
      _
    // Predicated region
    $region6: #{tpu_custom_call.1} parent=1 // pred_check
      _
    $region7: #{tpu_custom_call.1} parent=1 // pred_check_branch
      %28 = sbr.rel (0) target = $region9
    $region8: #{tpu_custom_call.1} parent=1 // pred_region
      %s29 = sadd.s32 0, 0
      %s30 = smul.u32 2, %s29
      %32 = vsyncadd [#allocation6], 0
      %s33 = smul.addr %s30, 8
      %s34 = scalar_lea.hbm %s1, %s33
      %s35 = sshll.u32 %s34, 4
      %s36 = int_to_ptr.hbm [resolvable:$true] %s35
      %s37 = sshll.u32 [#allocation5], 4
      %s38 = int_to_ptr.vmem [resolvable:$true] %s37
      %43 = dma.hbm_to_vmem [thread:$0]  %s36, 256, %s38, [#allocation6], 128, 128, 8
    $region9: #{tpu_custom_call.1} parent=1 // pred_fallthru
      _
    // Predicated region
    $region10: #{tpu_custom_call.1} parent=1 // pred_check
      _
    $region11: #{tpu_custom_call.1} parent=1 // pred_check_branch
      %45 = sbr.rel (0) target = $region13
    $region12: #{tpu_custom_call.1} parent=1 // pred_region
      %47 = dma.done [#allocation3], 256
    $region13: #{tpu_custom_call.1} parent=1 // pred_fallthru
      _
    // Predicated region
    $region14: #{tpu_custom_call.1} parent=1 // pred_check
      _
    $region15: #{tpu_custom_call.1} parent=1 // pred_check_branch
      %49 = sbr.rel (0) target = $region17
    $region16: #{tpu_custom_call.1} parent=1 // pred_region
      %51 = dma.done [#allocation6], 256
    $region17: #{tpu_custom_call.1} parent=1 // pred_fallthru
      _
    %s52 = sadd.s32 0, 0
    %s53 = smul.u32 2, %s52
    %s54 = sadd.s32 0, 0
    %s55 = smul.u32 2, %s54
    %p56 = scmp.eq.s32.totalorder 0, 0
    // Predicated region
    $region18: #{tpu_custom_call.1} parent=1 // pred_check
      %p57 = pneg %p56
    $region19: #{tpu_custom_call.1} parent=1 // pred_check_branch
      %59 = sbr.rel (%p57) target = $region21
    $region20: #{tpu_custom_call.1} parent=1 // pred_region
      %60 = vst [vmem:[#allocation7] sm:$0xff] 0.0
      %61 = vst [vmem:[#allocation7 + $0x8] sm:$0xff] 0.0
      %62 = vst [vmem:[#allocation7 + $0x10] sm:$0xff] 0.0
      %63 = vst [vmem:[#allocation7 + $0x18] sm:$0xff] 0.0
    $region21: #{tpu_custom_call.1} parent=1 // pred_fallthru
      _
    %v64 = vld [vmem:[#allocation2] sm:$0xff]
    %v65 = vld [vmem:[#allocation2 + $0x8] sm:$0xff]
    %v66 = vld [vmem:[#allocation5] sm:$0xff]
    %v67 = vld [vmem:[#allocation5 + $0x8] sm:$0xff]
    %v68 = vand.u32 2147483647, %v64
    %v69 = vand.u32 2147483647, %v65
    %v70 = vsub.f32 0.0, %v68
    %v71 = vsub.f32 0.0, %v69
    %v72 = vmul.f32 %v70, 1.442695
    %v73 = vpow.pop %v72
    %v74 = vmul.f32 %v71, 1.442695
    %v75 = vpow.pop %v74
    %v76 = vadd.f32 %v73, 1.0
    %v77 = vadd.f32 %v75, 1.0
    %v78 = vrcp.pop %v76
    %v79 = vmul.f32 %v76, %v78
    %v80 = vsub.f32 1.0, %v79
    %v81 = vmul.f32 %v78, %v80
    %v82 = vadd.f32 %v78, %v81
    %vm83 = vweird.f32 %v76
    %vm84 = vweird.f32 %v78
    %vm85 = vmor %vm83, %vm84
    %v86 = vsel %vm85, %v78, %v82
    %v87 = vand.u32 2147483647, %v76
    %vm88 = vcmp.eq.f32.partialorder %v87, 8.507059e+37
    %v89 = vand.u32 %v76, 2147483648
    %v90 = vor.u32 1.1754944e-38, %v89
    %v91 = vsel %vm88, %v90, %v86
    %v92 = vmul.f32 1.0, %v91
    %v93 = vrcp.pop %v77
    %v94 = vmul.f32 %v77, %v93
    %v95 = vsub.f32 1.0, %v94
    %v96 = vmul.f32 %v93, %v95
    %v97 = vadd.f32 %v93, %v96
    %vm98 = vweird.f32 %v77
    %vm99 = vweird.f32 %v93
    %vm100 = vmor %vm98, %vm99
    %v101 = vsel %vm100, %v93, %v97
    %v102 = vand.u32 2147483647, %v77
    %vm103 = vcmp.eq.f32.partialorder %v102, 8.507059e+37
    %v104 = vand.u32 %v77, 2147483648
    %v105 = vor.u32 1.1754944e-38, %v104
    %v106 = vsel %vm103, %v105, %v101
    %v107 = vmul.f32 1.0, %v106
    %vm108 = vcmp.ge.f32.partialorder %v64, 0.0
    %vm109 = vcmp.ge.f32.partialorder %v65, 0.0
    %v110 = vmul.f32 %v73, %v92
    %v111 = vmul.f32 %v75, %v107
    %v112 = vsel %vm108, %v92, %v110
    %v113 = vsel %vm109, %v107, %v111
    %v114 = vlog2.pop %v76
    %v115 = vmul.f32 %v114, 0.6931472
    %v116 = vlog2.pop %v77
    %v117 = vmul.f32 %v116, 0.6931472
    %v118 = vmax.f32 %v64, 0.0
    %v119 = vmax.f32 %v65, 0.0
    %v120 = vadd.f32 %v118, %v115
    %v121 = vadd.f32 %v119, %v117
    %v122 = vsub.f32 %v120, %v64
    %v123 = vsub.f32 %v121, %v65
    %v124 = vmin.f32 %v122, 100.0
    %v125 = vmin.f32 %v123, 100.0
    %v126 = vmul.f32 %v66, %v124
    %v127 = vmul.f32 %v67, %v125
    %v128 = vsub.f32 1.0, %v66
    %v129 = vsub.f32 1.0, %v67
    %v130 = vmin.f32 %v120, 100.0
    %v131 = vmin.f32 %v121, 100.0
    %v132 = vmul.f32 %v128, %v130
    %v133 = vmul.f32 %v129, %v131
    %v134 = vadd.f32 %v126, %v132
    %v135 = vadd.f32 %v127, %v133
    %v136 = vld [vmem:[#allocation7] sm:$0xff]
    %v137 = vmul.f32 %v112, %v66
    %v138 = vmul.f32 %v113, %v67
    %v139 = vadd.f32 %v137, %v138
    %v140 = vadd.f32 %v136, %v139
    %141 = vst [vmem:[#allocation7] sm:$0xff] %v140
    %s142 = scalar_lea.vmem [#allocation7], 8
    %v143 = vld [vmem:[%s142] sm:$0xff]
    %v144 = vadd.f32 %v112, %v113
    %v145 = vadd.f32 %v143, %v144
    %146 = vst [vmem:[%s142] sm:$0xff] %v145
    %s147 = scalar_lea.vmem [#allocation7], 16
    %v148 = vld [vmem:[%s147] sm:$0xff]
    %v149 = vadd.f32 %v66, %v67
    %v150 = vadd.f32 %v148, %v149
    %151 = vst [vmem:[%s147] sm:$0xff] %v150
    %s152 = scalar_lea.vmem [#allocation7], 24
    %v153 = vld [vmem:[%s152] sm:$0xff]
    %v154 = vadd.f32 %v134, %v135
    %v155 = vadd.f32 %v153, %v154
    %156 = vst [vmem:[%s152] sm:$0xff] %v155
    // Predicated region
    $region22: #{tpu_custom_call.1} parent=1 // pred_check
      _
    $region23: #{tpu_custom_call.1} parent=1 // pred_check_branch
      %158 = sbr.rel (0) target = $region25
    $region24: #{tpu_custom_call.1} parent=1 // pred_region
      %160 = vsyncadd [#allocation4], 0
      %s161 = sshll.u32 [#allocation7], 4
      %s162 = int_to_ptr.vmem [resolvable:$true] %s161
      %s163 = sshll.u32 %s2, 4
      %s164 = int_to_ptr.hbm [resolvable:$true] %s163
      %169 = dma.vmem_to_hbm [thread:$0]  %s162, 512, %s164, [#allocation4], 128, 128, 8
    $region25: #{tpu_custom_call.1} parent=1 // pred_fallthru
      _
    // Predicated region
    $region26: #{tpu_custom_call.1} parent=1 // pred_check
      _
    $region27: #{tpu_custom_call.1} parent=1 // pred_check_branch
      %171 = sbr.rel (0) target = $region29
    $region28: #{tpu_custom_call.1} parent=1 // pred_region
      %173 = dma.done [#allocation4], 512
    $region29: #{tpu_custom_call.1} parent=1 // pred_fallthru
      _
    %174 = vsyncpa [#allocation3], 1
    %175 = vsyncpa [#allocation6], 1
    %176 = vsyncpa [#allocation4], 1

</llo_original>
